<compile_context>
chip_gen: v6e
topology: v6e:2x2x1
jax: 0.10.0
libtpu: 0.0.40
codegen_flags: <defaults>
</compile_context>

<pallas_src>
import jax
import jax.numpy as jnp
from jax.experimental import pallas as pl
from jax.experimental.pallas import tpu as pltpu


def bow_fused_kernel(ids_ref,      # SMEM (L,)      int32 token ids
                     c_ref,        # VMEM (L*V, H)  fused embedding x (AvgPool-subsampled W_ih)
                     w_lin_ref,    # VMEM (H, H)    linear head; columns >= num_labels are zero
                     b_ref,        # VMEM (2, H)    row 0: b_ih + b_hh, row 1: padded b_lin
                     out_ref):     # VMEM (2, H)    row 0: new hidden h, row 1: padded sigmoid(logits)
    L = ids_ref.shape[0]
    LV, H = c_ref.shape
    V = LV // L

    # Lane-flat one-hot selector: lane r*V + v is 1.0 iff bow[r] == v.
    # Built with L cheap VPU compare+selects -- no MXU work, no dynamic slices, no reshapes.
    pos = jax.lax.broadcasted_iota(jnp.int32, (1, LV), 1)
    onehot = jnp.zeros((1, LV), jnp.float32)
    for r in range(L):                                   # L is small and static
        onehot = jnp.where(pos == r * V + ids_ref[r], 1.0, onehot)

    # Embedding gather + AvgPool1d(k=1, stride=L) subsample + RNN input projection,
    # all as a single (1, L*V) @ (L*V, H) MXU matmul.  h0 == 0 => the W_hh term is exactly 0.
    pre = jnp.dot(onehot, c_ref[...], preferred_element_type=jnp.float32) + b_ref[0:1, :]
    h = jnp.tanh(pre)                                    # (1, H)

    logits = jnp.dot(h, w_lin_ref[...], preferred_element_type=jnp.float32) + b_ref[1:2, :]

    out_ref[0:1, :] = h
    out_ref[1:2, :] = jax.nn.sigmoid(logits)             # padded lanes hold sigmoid(0)=0.5; wrapper slices them off


def bow_classifier_forward(bow_vec, params):
    """Forward pass of the module. bow_vec: (L,) int token ids. Returns (probs, new_hidden)."""
    V = params["embedding"].shape[0]
    H = params["w_hh"].shape[0]
    num_labels = params["b_lin"].shape[1]

    # nn.Embedding would reject OOB ids; clamp so the one-hot match is well defined.
    ids = jnp.clip(bow_vec.astype(jnp.int32), 0, V - 1)

    out = pl.pallas_call(
        bow_fused_kernel,
        out_shape=jax.ShapeDtypeStruct((2, H), jnp.float32),
        in_specs=[
            pl.BlockSpec(memory_space=pltpu.MemorySpace.SMEM),   # token ids (scalar reads)
            pl.BlockSpec(memory_space=pltpu.MemorySpace.VMEM),   # fused gather/projection matrix
            pl.BlockSpec(memory_space=pltpu.MemorySpace.VMEM),   # linear head
            pl.BlockSpec(memory_space=pltpu.MemorySpace.VMEM),   # biases (2, H)
        ],
        out_specs=pl.BlockSpec(memory_space=pltpu.MemorySpace.VMEM),
    )(ids, params["c_fused"], params["w_lin_p"], params["b2"])

    return out[1:2, :num_labels], out[0:1, :]


def make_params(key, vocab, embedding_dim, hidden_dim, num_labels, seq_len):
    """PyTorch-equivalent parameters plus init-time fused kernel operands (zero runtime cost)."""
    ks = jax.random.split(key, 7)
    s = 0.1
    V, E, H, L = vocab, embedding_dim, hidden_dim, seq_len
    emb = jax.random.normal(ks[0], (V, E), jnp.float32)
    # Dense weights stored as (in, out) == PyTorch weight.T
    w_ih = s * jax.random.normal(ks[1], (E, H), jnp.float32)
    w_hh = s * jax.random.normal(ks[2], (H, H), jnp.float32)   # unused in kernel: h0 == 0
    b_ih = s * jax.random.normal(ks[3], (1, H), jnp.float32)
    b_hh = s * jax.random.normal(ks[4], (1, H), jnp.float32)
    w_lin = s * jax.random.normal(ks[5], (H, num_labels), jnp.float32)
    b_lin = s * jax.random.normal(ks[6], (1, num_labels), jnp.float32)

    # AvgPool1d(kernel=1, stride=L) over the row-major flatten of the (L, E) gathered embeddings
    # selects flat[j*L], j = 0..E-1:   final_input[j] = emb[bow[(j*L)//E], (j*L)%E].
    # Fold that selection AND the embedding table into W_ih so the kernel's gather + projection
    # is a single matmul against a one-hot selector:
    #   c_fused[r*V + v, h] = sum_{j : (j*L)//E == r} emb[v, (j*L)%E] * w_ih[j, h]
    j = jnp.arange(E)
    pool_rows = (j * L) // E                                   # gathered row feeding input feature j
    pool_cols = (j * L) % E                                    # embedding column feeding input feature j
    sel = (pool_rows[None, :] == jnp.arange(L)[:, None]).astype(jnp.float32)   # (L, E)
    emb_g = emb[:, pool_cols]                                                  # (V, E)
    c_fused = jnp.einsum("rj,vj,jh->rvh", sel, emb_g, w_ih,
                         precision="highest").reshape(L * V, H)

    # Pad the tiny linear head from num_labels to H output columns so both kernel outputs
    # (hidden state and probabilities) share a single (2, H) buffer; padded columns are zero.
    w_lin_p = jnp.pad(w_lin, ((0, 0), (0, H - num_labels)))
    b_lin_p = jnp.pad(b_lin, ((0, 0), (0, H - num_labels)))
    b2 = jnp.concatenate([b_ih + b_hh, b_lin_p], axis=0)        # (2, H)

    return {
        "embedding": emb,
        "w_ih": w_ih, "w_hh": w_hh, "b_ih": b_ih, "b_hh": b_hh,
        "w_lin": w_lin, "b_lin": b_lin,
        "c_fused": c_fused, "w_lin_p": w_lin_p, "b2": b2,
    }


def reference_forward(bow_vec, params):
    """Pure-JAX reference mirroring the PyTorch module (h0 = zeros, full formula)."""
    emb = params["embedding"][bow_vec]                       # (L, E)
    E = params["embedding"].shape[1]
    L = bow_vec.shape[0]
    x = emb.reshape(-1)[::L][:E].reshape(1, E)               # AvgPool1d(kernel=1, stride=L)
    H = params["w_hh"].shape[0]
    h0 = jnp.zeros((1, H), jnp.float32)
    h = jnp.tanh(x @ params["w_ih"] + params["b_ih"]
                 + h0 @ params["w_hh"] + params["b_hh"])
    return jax.nn.sigmoid(h @ params["w_lin"] + params["b_lin"]), h


if __name__ == "__main__":
    VOCAB = 32
    EMBEDDING_DIM = 32
    HIDDEN_DIM = 32          # the PyTorch module only runs when hidden_dim == embedding_dim
    NUM_LABELS = 4
    SEQ_LEN = 8

    key = jax.random.PRNGKey(0)
    pkey, ikey = jax.random.split(key)
    params = make_params(pkey, VOCAB, EMBEDDING_DIM, HIDDEN_DIM, NUM_LABELS, SEQ_LEN)
    bow_vec = jax.random.randint(ikey, (SEQ_LEN,), 0, VOCAB, dtype=jnp.int32)

    y, h_new = bow_classifier_forward(bow_vec, params)
    y = jax.block_until_ready(y)
    h_new = jax.block_until_ready(h_new)

    y_ref, h_ref = reference_forward(bow_vec, params)
    assert y.shape == (1, NUM_LABELS) and h_new.shape == (1, HIDDEN_DIM)
    assert jnp.allclose(y, y_ref, atol=1e-4, rtol=1e-4)
    assert jnp.allclose(h_new, h_ref, atol=1e-4, rtol=1e-4)

    print("KERNEL_OK")
</pallas_src>

<mosaic_0001>
module attributes {stable_mosaic.version = 11 : i64} {
  func.func @bow_fused_kernel(%arg0: memref<8xi32, #tpu.memory_space<smem>>, %arg1: memref<256x32xf32, #tpu.memory_space<vmem>>, %arg2: memref<32x32xf32, #tpu.memory_space<vmem>>, %arg3: memref<2x32xf32, #tpu.memory_space<vmem>>, %arg4: memref<2x32xf32, #tpu.memory_space<vmem>>) attributes {dimension_semantics = [], scalar_prefetch = 0 : i64, scratch_operands = 0 : i64, tpu.core_type = #tpu.core_type<tc>} {
    %0 = tpu.iota {dimensions = array<i32: 1>} : vector<1x256xi32>
    %cst = arith.constant 0.000000e+00 : f32
    %1 = vector.broadcast %cst : f32 to vector<1x256xf32>
    %c0 = arith.constant 0 : index
    %2 = memref.load %arg0[%c0] : memref<8xi32, #tpu.memory_space<smem>>
    %c0_i32 = arith.constant 0 : i32
    %3 = arith.addi %c0_i32, %2 : i32
    %4 = vector.broadcast %3 : i32 to vector<1x256xi32>
    %5 = arith.cmpi eq, %0, %4 : vector<1x256xi32>
    %cst_0 = arith.constant 1.000000e+00 : f32
    %6 = vector.broadcast %cst_0 : f32 to vector<1x256xf32>
    %7 = arith.select %5, %6, %1 : vector<1x256xi1>, vector<1x256xf32>
    %c1 = arith.constant 1 : index
    %8 = memref.load %arg0[%c1] : memref<8xi32, #tpu.memory_space<smem>>
    %c32_i32 = arith.constant 32 : i32
    %9 = arith.addi %c32_i32, %8 : i32
    %10 = vector.broadcast %9 : i32 to vector<1x256xi32>
    %11 = arith.cmpi eq, %0, %10 : vector<1x256xi32>
    %cst_1 = arith.constant 1.000000e+00 : f32
    %12 = vector.broadcast %cst_1 : f32 to vector<1x256xf32>
    %13 = arith.select %11, %12, %7 : vector<1x256xi1>, vector<1x256xf32>
    %c2 = arith.constant 2 : index
    %14 = memref.load %arg0[%c2] : memref<8xi32, #tpu.memory_space<smem>>
    %c64_i32 = arith.constant 64 : i32
    %15 = arith.addi %c64_i32, %14 : i32
    %16 = vector.broadcast %15 : i32 to vector<1x256xi32>
    %17 = arith.cmpi eq, %0, %16 : vector<1x256xi32>
    %cst_2 = arith.constant 1.000000e+00 : f32
    %18 = vector.broadcast %cst_2 : f32 to vector<1x256xf32>
    %19 = arith.select %17, %18, %13 : vector<1x256xi1>, vector<1x256xf32>
    %c3 = arith.constant 3 : index
    %20 = memref.load %arg0[%c3] : memref<8xi32, #tpu.memory_space<smem>>
    %c96_i32 = arith.constant 96 : i32
    %21 = arith.addi %c96_i32, %20 : i32
    %22 = vector.broadcast %21 : i32 to vector<1x256xi32>
    %23 = arith.cmpi eq, %0, %22 : vector<1x256xi32>
    %cst_3 = arith.constant 1.000000e+00 : f32
    %24 = vector.broadcast %cst_3 : f32 to vector<1x256xf32>
    %25 = arith.select %23, %24, %19 : vector<1x256xi1>, vector<1x256xf32>
    %c4 = arith.constant 4 : index
    %26 = memref.load %arg0[%c4] : memref<8xi32, #tpu.memory_space<smem>>
    %c128_i32 = arith.constant 128 : i32
    %27 = arith.addi %c128_i32, %26 : i32
    %28 = vector.broadcast %27 : i32 to vector<1x256xi32>
    %29 = arith.cmpi eq, %0, %28 : vector<1x256xi32>
    %cst_4 = arith.constant 1.000000e+00 : f32
    %30 = vector.broadcast %cst_4 : f32 to vector<1x256xf32>
    %31 = arith.select %29, %30, %25 : vector<1x256xi1>, vector<1x256xf32>
    %c5 = arith.constant 5 : index
    %32 = memref.load %arg0[%c5] : memref<8xi32, #tpu.memory_space<smem>>
    %c160_i32 = arith.constant 160 : i32
    %33 = arith.addi %c160_i32, %32 : i32
    %34 = vector.broadcast %33 : i32 to vector<1x256xi32>
    %35 = arith.cmpi eq, %0, %34 : vector<1x256xi32>
    %cst_5 = arith.constant 1.000000e+00 : f32
    %36 = vector.broadcast %cst_5 : f32 to vector<1x256xf32>
    %37 = arith.select %35, %36, %31 : vector<1x256xi1>, vector<1x256xf32>
    %c6 = arith.constant 6 : index
    %38 = memref.load %arg0[%c6] : memref<8xi32, #tpu.memory_space<smem>>
    %c192_i32 = arith.constant 192 : i32
    %39 = arith.addi %c192_i32, %38 : i32
    %40 = vector.broadcast %39 : i32 to vector<1x256xi32>
    %41 = arith.cmpi eq, %0, %40 : vector<1x256xi32>
    %cst_6 = arith.constant 1.000000e+00 : f32
    %42 = vector.broadcast %cst_6 : f32 to vector<1x256xf32>
    %43 = arith.select %41, %42, %37 : vector<1x256xi1>, vector<1x256xf32>
    %c7 = arith.constant 7 : index
    %44 = memref.load %arg0[%c7] : memref<8xi32, #tpu.memory_space<smem>>
    %c224_i32 = arith.constant 224 : i32
    %45 = arith.addi %c224_i32, %44 : i32
    %46 = vector.broadcast %45 : i32 to vector<1x256xi32>
    %47 = arith.cmpi eq, %0, %46 : vector<1x256xi32>
    %cst_7 = arith.constant 1.000000e+00 : f32
    %48 = vector.broadcast %cst_7 : f32 to vector<1x256xf32>
    %49 = arith.select %47, %48, %43 : vector<1x256xi1>, vector<1x256xf32>
    %c0_8 = arith.constant 0 : index
    %c0_9 = arith.constant 0 : index
    %50 = vector.load %arg1[%c0_8, %c0_9] : memref<256x32xf32, #tpu.memory_space<vmem>>, vector<256x32xf32>
    %cst_10 = arith.constant dense<0.000000e+00> : vector<1x32xf32>
    %51 = tpu.matmul %49, %50, %cst_10 {dimension_numbers = #tpu.dot_dimension_numbers<[1], [0], [0], [1], [0, 0, 1, 1], [], []>} : vector<1x256xf32>, vector<256x32xf32>, vector<1x32xf32> -> vector<1x32xf32>
    %c0_11 = arith.constant 0 : index
    %c0_12 = arith.constant 0 : index
    %52 = vector.load %arg3[%c0_11, %c0_12] : memref<2x32xf32, #tpu.memory_space<vmem>>, vector<1x32xf32>
    %53 = arith.addf %51, %52 : vector<1x32xf32>
    %54 = math.tanh %53 : vector<1x32xf32>
    %c0_13 = arith.constant 0 : index
    %c0_14 = arith.constant 0 : index
    %55 = vector.load %arg2[%c0_13, %c0_14] : memref<32x32xf32, #tpu.memory_space<vmem>>, vector<32x32xf32>
    %cst_15 = arith.constant dense<0.000000e+00> : vector<1x32xf32>
    %56 = tpu.matmul %54, %55, %cst_15 {dimension_numbers = #tpu.dot_dimension_numbers<[1], [0], [0], [1], [0, 0, 1, 1], [], []>} : vector<1x32xf32>, vector<32x32xf32>, vector<1x32xf32> -> vector<1x32xf32>
    %c1_16 = arith.constant 1 : index
    %c0_17 = arith.constant 0 : index
    %57 = vector.load %arg3[%c1_16, %c0_17] : memref<2x32xf32, #tpu.memory_space<vmem>>, vector<1x32xf32>
    %58 = arith.addf %56, %57 : vector<1x32xf32>
    %c0_18 = arith.constant 0 : index
    %c0_19 = arith.constant 0 : index
    %59 = vector.load %arg4[%c0_18, %c0_19] : memref<2x32xf32, #tpu.memory_space<vmem>>, vector<1x32xf32>
    tpu.vector_store %arg4[%c0_18, %c0_19], %54 {strides = array<i32>} : memref<2x32xf32, #tpu.memory_space<vmem>>, vector<1x32xf32>,
    %60 = arith.negf %58 : vector<1x32xf32>
    %61 = math.exp %60 : vector<1x32xf32>
    %cst_20 = arith.constant 1.000000e+00 : f32
    %62 = vector.broadcast %cst_20 : f32 to vector<1x32xf32>
    %63 = arith.addf %62, %61 : vector<1x32xf32>
    %64 = arith.divf %62, %63 : vector<1x32xf32>
    %c1_21 = arith.constant 1 : index
    %c0_22 = arith.constant 0 : index
    %65 = vector.load %arg4[%c1_21, %c0_22] : memref<2x32xf32, #tpu.memory_space<vmem>>, vector<1x32xf32>
    tpu.vector_store %arg4[%c1_21, %c0_22], %64 {strides = array<i32>} : memref<2x32xf32, #tpu.memory_space<vmem>>, vector<1x32xf32>,
    return
  }
}

</mosaic_0001>

<llo_original>
// kernel: tpu_custom_call.1
$region0: #{tpu_custom_call.1}
  #allocation0 [shape = 'u32[]', space=smem, size = 0x4, offset = 0x4, fixed_abs, tag = 'smem constant byte address 0x4 - core index']
  #allocation1 [shape = 'u32[144,128]{1,0:T(1,128)}', space=vmem, size = 0x12000, scoped, tag = 'internal scratch']
  %s0 = inlined_call_operand.vmem [shape: s32[8], index: 0, kind: input, shape index: {}]
  %s1 = inlined_call_operand.vmem [shape: f32[256,32], index: 1, kind: input, shape index: {}]
  %s2 = inlined_call_operand.vmem [shape: f32[32,32], index: 2, kind: input, shape index: {}]
  %s3 = inlined_call_operand.vmem [shape: f32[2,32], index: 3, kind: input, shape index: {}]
  %s4 = inlined_call_operand.hbm [shape: f32[2,32], index: 4, kind: output, shape index: {}]
  %s5 = sld [smem:[#allocation0]]
  $region30: #{tpu_custom_call.1} parent=0
    _
  %s7 = ssub.s32 1, %s5
  %s8 = scalar_select 0, %s7, %s5
  $region1: #{tpu_custom_call.1} parent=0
    #allocation2 [shape = 'u8[512]{0}', space=smem, size = 0x200, scoped, tag = 'input window, operand 0, single buffered']
    #allocation3 [shape = 's32[1]{0}', space=sflag, size = 0x4, scoped, tag = 'scoped memory for tpu_custom_call.1']
    #allocation4 [shape = 's32[1]{0}', space=sflag, size = 0x4, scoped, tag = 'scoped memory for tpu_custom_call.1']
    #allocation5 [shape = 'u8[1024]{0}', space=vmem, size = 0x400, scoped, tag = 'output window, operand 0, single buffered']
    %9 = vsyncpa [#allocation4], 0
    %10 = vsyncpa [#allocation3], 0
    // Predicated region
    $region2: #{tpu_custom_call.1} parent=1 // pred_check
      _
    $region3: #{tpu_custom_call.1} parent=1 // pred_check_branch
      %12 = sbr.rel (0) target = $region5
    $region4: #{tpu_custom_call.1} parent=1 // pred_region
      %s14 = ssub.s32 16, 16
      %15 = vsyncadd [#allocation4], %s14
      %s17 = sshll.u32 %s0, 4
      %s18 = int_to_ptr.vmem [resolvable:$true] %s17
      %20 = dma.vmem_to_smem %s18, 16, [#allocation2], [#allocation4]
    $region5: #{tpu_custom_call.1} parent=1 // pred_fallthru
      _
    // Predicated region
    $region6: #{tpu_custom_call.1} parent=1 // pred_check
      _
    $region7: #{tpu_custom_call.1} parent=1 // pred_check_branch
      %22 = sbr.rel (0) target = $region9
    $region8: #{tpu_custom_call.1} parent=1 // pred_region
      _
    $region9: #{tpu_custom_call.1} parent=1 // pred_fallthru
      _
    // Predicated region
    $region10: #{tpu_custom_call.1} parent=1 // pred_check
      _
    $region11: #{tpu_custom_call.1} parent=1 // pred_check_branch
      %24 = sbr.rel (0) target = $region13
    $region12: #{tpu_custom_call.1} parent=1 // pred_region
      _
    $region13: #{tpu_custom_call.1} parent=1 // pred_fallthru
      _
    // Predicated region
    $region14: #{tpu_custom_call.1} parent=1 // pred_check
      _
    $region15: #{tpu_custom_call.1} parent=1 // pred_check_branch
      %26 = sbr.rel (0) target = $region17
    $region16: #{tpu_custom_call.1} parent=1 // pred_region
      _
    $region17: #{tpu_custom_call.1} parent=1 // pred_fallthru
      _
    // Predicated region
    $region18: #{tpu_custom_call.1} parent=1 // pred_check
      _
    $region19: #{tpu_custom_call.1} parent=1 // pred_check_branch
      %28 = sbr.rel (0) target = $region21
    $region20: #{tpu_custom_call.1} parent=1 // pred_region
      %29 = dma.done [#allocation4], 16
    $region21: #{tpu_custom_call.1} parent=1 // pred_fallthru
      _
    %30 = sfence
    %v31 = vlaneseq
    %v32 = vand.u32 %v31, 127
    %v33 = vadd.s32 %v32, 128
    %s34 = sld [smem:[#allocation2]]
    %v35 = vstv %s34
    %vm36 = vcmp.eq.s32.totalorder %v32, %v35
    %vm37 = vcmp.eq.s32.totalorder %v33, %v35
    %v38 = vsel %vm36, 1.0, 0.0
    %v39 = vsel %vm37, 1.0, 0.0
    %s40 = sld [smem:[#allocation2 + $0x1]]
    %s41 = sadd.s32 %s40, 32
    %v42 = vstv %s41
    %vm43 = vcmp.eq.s32.totalorder %v32, %v42
    %vm44 = vcmp.eq.s32.totalorder %v33, %v42
    %v45 = vsel %vm43, 1.0, %v38
    %v46 = vsel %vm44, 1.0, %v39
    %s47 = sld [smem:[#allocation2 + $0x2]]
    %s48 = sadd.s32 %s47, 64
    %v49 = vstv %s48
    %vm50 = vcmp.eq.s32.totalorder %v32, %v49
    %vm51 = vcmp.eq.s32.totalorder %v33, %v49
    %v52 = vsel %vm50, 1.0, %v45
    %v53 = vsel %vm51, 1.0, %v46
    %s54 = sld [smem:[#allocation2 + $0x3]]
    %s55 = sadd.s32 %s54, 96
    %v56 = vstv %s55
    %vm57 = vcmp.eq.s32.totalorder %v32, %v56
    %vm58 = vcmp.eq.s32.totalorder %v33, %v56
    %v59 = vsel %vm57, 1.0, %v52
    %v60 = vsel %vm58, 1.0, %v53
    %s61 = sld [smem:[#allocation2 + $0x4]]
    %s62 = sadd.s32 %s61, 128
    %v63 = vstv %s62
    %vm64 = vcmp.eq.s32.totalorder %v32, %v63
    %vm65 = vcmp.eq.s32.totalorder %v33, %v63
    %v66 = vsel %vm64, 1.0, %v59
    %v67 = vsel %vm65, 1.0, %v60
    %s68 = sld [smem:[#allocation2 + $0x5]]
    %s69 = sadd.s32 %s68, 160
    %v70 = vstv %s69
    %vm71 = vcmp.eq.s32.totalorder %v32, %v70
    %vm72 = vcmp.eq.s32.totalorder %v33, %v70
    %v73 = vsel %vm71, 1.0, %v66
    %v74 = vsel %vm72, 1.0, %v67
    %s75 = sld [smem:[#allocation2 + $0x6]]
    %s76 = sadd.s32 %s75, 192
    %v77 = vstv %s76
    %vm78 = vcmp.eq.s32.totalorder %v32, %v77
    %vm79 = vcmp.eq.s32.totalorder %v33, %v77
    %v80 = vsel %vm78, 1.0, %v73
    %v81 = vsel %vm79, 1.0, %v74
    %s82 = sld [smem:[#allocation2 + $0x7]]
    %s83 = sadd.s32 %s82, 224
    %v84 = vstv %s83
    %vm85 = vcmp.eq.s32.totalorder %v32, %v84
    %vm86 = vcmp.eq.s32.totalorder %v33, %v84
    %v87 = vsel %vm85, 1.0, %v80
    %v88 = vsel %vm86, 1.0, %v81
    %v89 = vld [vmem:[%s1] sm:$0xff]
    %v90 = vld [vmem:[%s1 + $0x8] sm:$0xff]
    %v91 = vld [vmem:[%s1 + $0x10] sm:$0xff]
    %v92 = vld [vmem:[%s1 + $0x18] sm:$0xff]
    %v93 = vld [vmem:[%s1 + $0x20] sm:$0xff]
    %v94 = vld [vmem:[%s1 + $0x28] sm:$0xff]
    %v95 = vld [vmem:[%s1 + $0x30] sm:$0xff]
    %v96 = vld [vmem:[%s1 + $0x38] sm:$0xff]
    %v97 = vld [vmem:[%s1 + $0x40] sm:$0xff]
    %v98 = vld [vmem:[%s1 + $0x48] sm:$0xff]
    %v99 = vld [vmem:[%s1 + $0x50] sm:$0xff]
    %v100 = vld [vmem:[%s1 + $0x58] sm:$0xff]
    %v101 = vld [vmem:[%s1 + $0x60] sm:$0xff]
    %v102 = vld [vmem:[%s1 + $0x68] sm:$0xff]
    %v103 = vld [vmem:[%s1 + $0x70] sm:$0xff]
    %v104 = vld [vmem:[%s1 + $0x78] sm:$0xff]
    %v105 = vld [vmem:[%s1 + $0x80] sm:$0xff]
    %v106 = vld [vmem:[%s1 + $0x88] sm:$0xff]
    %v107 = vld [vmem:[%s1 + $0x90] sm:$0xff]
    %v108 = vld [vmem:[%s1 + $0x98] sm:$0xff]
    %v109 = vld [vmem:[%s1 + $0xa0] sm:$0xff]
    %v110 = vld [vmem:[%s1 + $0xa8] sm:$0xff]
    %v111 = vld [vmem:[%s1 + $0xb0] sm:$0xff]
    %v112 = vld [vmem:[%s1 + $0xb8] sm:$0xff]
    %v113 = vld [vmem:[%s1 + $0xc0] sm:$0xff]
    %v114 = vld [vmem:[%s1 + $0xc8] sm:$0xff]
    %v115 = vld [vmem:[%s1 + $0xd0] sm:$0xff]
    %v116 = vld [vmem:[%s1 + $0xd8] sm:$0xff]
    %v117 = vld [vmem:[%s1 + $0xe0] sm:$0xff]
    %v118 = vld [vmem:[%s1 + $0xe8] sm:$0xff]
    %v119 = vld [vmem:[%s1 + $0xf0] sm:$0xff]
    %v120 = vld [vmem:[%s1 + $0xf8] sm:$0xff]
    %v121 = vld [vmem:[%s3] sm:$0x1]
    %122 = vmatprep.subr.mxu0 0.0
    %123 = vmatpush1.msra.mxu0 %v104
    %124 = vmatprep.subr.mxu0 0.0
    %125 = vmatpush1.msra.mxu0 %v103
    %126 = vmatprep.subr.mxu0 0.0
    %127 = vmatpush1.msra.mxu0 %v102
    %128 = vmatprep.subr.mxu0 0.0
    %129 = vmatpush1.msra.mxu0 %v101
    %130 = vmatprep.subr.mxu0 0.0
    %131 = vmatpush1.msra.mxu0 %v100
    %132 = vmatprep.subr.mxu0 0.0
    %133 = vmatpush1.msra.mxu0 %v99
    %134 = vmatprep.subr.mxu0 0.0
    %135 = vmatpush1.msra.mxu0 %v98
    %136 = vmatprep.subr.mxu0 0.0
    %137 = vmatpush1.msra.mxu0 %v97
    %138 = vmatprep.subr.mxu0 0.0
    %139 = vmatpush1.msra.mxu0 %v96
    %140 = vmatprep.subr.mxu0 0.0
    %141 = vmatpush1.msra.mxu0 %v95
    %142 = vmatprep.subr.mxu0 0.0
    %143 = vmatpush1.msra.mxu0 %v94
    %144 = vmatprep.subr.mxu0 0.0
    %145 = vmatpush1.msra.mxu0 %v93
    %146 = vmatprep.subr.mxu0 0.0
    %147 = vmatpush1.msra.mxu0 %v92
    %148 = vmatprep.subr.mxu0 0.0
    %149 = vmatpush1.msra.mxu0 %v91
    %150 = vmatprep.subr.mxu0 0.0
    %151 = vmatpush1.msra.mxu0 %v90
    %152 = vmatprep.subr.mxu0 0.0
    %153 = vmatpush1.msra.mxu0 %v89
    %154 = vmatprep.subr.mxu0 0.0
    %155 = vmatpush2.msra.mxu0 %v120
    %156 = vmatprep.subr.mxu0 0.0
    %157 = vmatpush2.msra.mxu0 %v119
    %158 = vmatprep.subr.mxu0 0.0
    %159 = vmatpush2.msra.mxu0 %v118
    %160 = vmatprep.subr.mxu0 0.0
    %161 = vmatpush2.msra.mxu0 %v117
    %162 = vmatprep.subr.mxu0 0.0
    %163 = vmatpush2.msra.mxu0 %v116
    %164 = vmatprep.subr.mxu0 0.0
    %165 = vmatpush2.msra.mxu0 %v115
    %166 = vmatprep.subr.mxu0 0.0
    %167 = vmatpush2.msra.mxu0 %v114
    %168 = vmatprep.subr.mxu0 0.0
    %169 = vmatpush2.msra.mxu0 %v113
    %170 = vmatprep.subr.mxu0 0.0
    %171 = vmatpush2.msra.mxu0 %v112
    %172 = vmatprep.subr.mxu0 0.0
    %173 = vmatpush2.msra.mxu0 %v111
    %174 = vmatprep.subr.mxu0 0.0
    %175 = vmatpush2.msra.mxu0 %v110
    %176 = vmatprep.subr.mxu0 0.0
    %177 = vmatpush2.msra.mxu0 %v109
    %178 = vmatprep.subr.mxu0 0.0
    %179 = vmatpush2.msra.mxu0 %v108
    %180 = vmatprep.subr.mxu0 0.0
    %181 = vmatpush2.msra.mxu0 %v107
    %182 = vmatprep.subr.mxu0 0.0
    %183 = vmatpush2.msra.mxu0 %v106
    %184 = vmatprep.subr.mxu0 0.0
    %185 = vmatpush2.msra.mxu0 %v105
    %186 = vmatprep.mubr.f32.mxu0 %v88
    %187 = vmatmul.mubr.f32.gmra.mxu0 %v87
    %v188 = vpop.f32.mrf.mxu0
    %v189 = vadd.f32 %v121, %v188
    %v190 = vpop.f32.mrf.mxu0
    %191 = vdwg.mxu0
    %v192 = vtanh.pop %v189
    %v193 = vld [vmem:[%s2] sm:$0xff]
    %v194 = vld [vmem:[%s2 + $0x8] sm:$0xff]
    %v195 = vld [vmem:[%s2 + $0x10] sm:$0xff]
    %v196 = vld [vmem:[%s2 + $0x18] sm:$0xff]
    %v197 = vld [vmem:[%s3 + $0x1] sm:$0x1]
    %vm198 = vcmask 261120
    %v200 = vsel %vm198, %v192, 0
    %202 = vmatprep.subr.mxu0 0.0
    %203 = vmatpush1.msra.mxu0 0.0
    %204 = vmatprep.subr.mxu0 0.0
    %205 = vmatpush1.msra.mxu0 0.0
    %206 = vmatprep.subr.mxu0 0.0
    %207 = vmatpush1.msra.mxu0 0.0
    %208 = vmatprep.subr.mxu0 0.0
    %209 = vmatpush1.msra.mxu0 0.0
    %210 = vmatprep.subr.mxu0 0.0
    %211 = vmatpush1.msra.mxu0 0.0
    %212 = vmatprep.subr.mxu0 0.0
    %213 = vmatpush1.msra.mxu0 0.0
    %214 = vmatprep.subr.mxu0 0.0
    %215 = vmatpush1.msra.mxu0 0.0
    %216 = vmatprep.subr.mxu0 0.0
    %217 = vmatpush1.msra.mxu0 0.0
    %218 = vmatprep.subr.mxu0 0.0
    %219 = vmatpush1.msra.mxu0 0.0
    %220 = vmatprep.subr.mxu0 0.0
    %221 = vmatpush1.msra.mxu0 0.0
    %222 = vmatprep.subr.mxu0 0.0
    %223 = vmatpush1.msra.mxu0 0.0
    %224 = vmatprep.subr.mxu0 0.0
    %225 = vmatpush1.msra.mxu0 0.0
    %226 = vmatprep.subr.mxu0 0.0
    %227 = vmatpush1.msra.mxu0 %v196
    %228 = vmatprep.subr.mxu0 0.0
    %229 = vmatpush1.msra.mxu0 %v195
    %230 = vmatprep.subr.mxu0 0.0
    %231 = vmatpush1.msra.mxu0 %v194
    %232 = vmatprep.subr.mxu0 0.0
    %233 = vmatpush1.msra.mxu0 %v193
    %234 = vmatprep.subr.mxu0 0.0
    %235 = vmatpush2.msra.mxu0 0.0
    %236 = vmatprep.subr.mxu0 0.0
    %237 = vmatpush2.msra.mxu0 0.0
    %238 = vmatprep.subr.mxu0 0.0
    %239 = vmatpush2.msra.mxu0 0.0
    %240 = vmatprep.subr.mxu0 0.0
    %241 = vmatpush2.msra.mxu0 0.0
    %242 = vmatprep.subr.mxu0 0.0
    %243 = vmatpush2.msra.mxu0 0.0
    %244 = vmatprep.subr.mxu0 0.0
    %245 = vmatpush2.msra.mxu0 0.0
    %246 = vmatprep.subr.mxu0 0.0
    %247 = vmatpush2.msra.mxu0 0.0
    %248 = vmatprep.subr.mxu0 0.0
    %249 = vmatpush2.msra.mxu0 0.0
    %250 = vmatprep.subr.mxu0 0.0
    %251 = vmatpush2.msra.mxu0 0.0
    %252 = vmatprep.subr.mxu0 0.0
    %253 = vmatpush2.msra.mxu0 0.0
    %254 = vmatprep.subr.mxu0 0.0
    %255 = vmatpush2.msra.mxu0 0.0
    %256 = vmatprep.subr.mxu0 0.0
    %257 = vmatpush2.msra.mxu0 0.0
    %258 = vmatprep.subr.mxu0 0.0
    %259 = vmatpush2.msra.mxu0 0.0
    %260 = vmatprep.subr.mxu0 0.0
    %261 = vmatpush2.msra.mxu0 0.0
    %262 = vmatprep.subr.mxu0 0.0
    %263 = vmatpush2.msra.mxu0 0.0
    %264 = vmatprep.subr.mxu0 0.0
    %265 = vmatpush2.msra.mxu0 0.0
    %266 = vmatprep.mubr.f32.mxu0 0.0
    %267 = vmatmul.mubr.f32.gmra.mxu0 %v200
    %v268 = vpop.f32.mrf.mxu0
    %v269 = vadd.f32 %v197, %v268
    %v270 = vpop.f32.mrf.mxu0
    %271 = vdwg.mxu0
    %vm272 = vcmask 253952
    %273 = vst.msk [vmem:[#allocation5] sm:$0x1] %vm272, %v192
    %v274 = vxor.u32 %v269, 2147483648
    %v275 = vmul.f32 %v274, 1.442695
    %v276 = vpow.pop %v275
    %v277 = vadd.f32 %v276, 1.0
    %v278 = vrcp.pop %v277
    %v279 = vmul.f32 1.0, %v278
    %280 = vst.msk [vmem:[#allocation5 + $0x1] sm:$0x1] %vm272, %v279
    // Predicated region
    $region22: #{tpu_custom_call.1} parent=1 // pred_check
      _
    $region23: #{tpu_custom_call.1} parent=1 // pred_check_branch
      %282 = sbr.rel (0) target = $region25
    $region24: #{tpu_custom_call.1} parent=1 // pred_region
      %s284 = ssub.s32 32, 32
      %285 = vsyncadd [#allocation3], %s284
      %s287 = sshll.u32 [#allocation5], 4
      %s288 = int_to_ptr.vmem [resolvable:$true] %s287
      %290 = dma.vmem_to_hbm [thread:$0]  %s288, 32, %s4, [#allocation3]
    $region25: #{tpu_custom_call.1} parent=1 // pred_fallthru
      _
    // Predicated region
    $region26: #{tpu_custom_call.1} parent=1 // pred_check
      _
    $region27: #{tpu_custom_call.1} parent=1 // pred_check_branch
      %292 = sbr.rel (0) target = $region29
    $region28: #{tpu_custom_call.1} parent=1 // pred_region
      %293 = dma.done [#allocation3], 32
    $region29: #{tpu_custom_call.1} parent=1 // pred_fallthru
      _
    %294 = vsyncpa [#allocation3], 1
    %295 = vsyncpa [#allocation4], 1

</llo_original>
